<compile_context>
chip_gen: v5e
topology: v5e:2x2
jax: 0.10.0
libtpu: 0.0.40
codegen_flags: <defaults>
</compile_context>

<pallas_src>
import functools

import jax
import jax.numpy as jnp
from jax.experimental import pallas as pl
from jax.experimental.pallas import tpu as pltpu


def _round_up(a: int, b: int) -> int:
    return -(-a // b) * b


def _sublane_multiple(dtype) -> int:
    # f32 -> 8, bf16 -> 16, int8/fp8 -> 32 (sublane packing granularity).
    itemsize = jnp.dtype(dtype).itemsize
    return {4: 8, 2: 16, 1: 32}.get(itemsize, 8)


def _device_defaults():
    """Generation-aware tile / VMEM defaults."""
    kind = ""
    try:
        kind = jax.devices()[0].device_kind.lower()
    except Exception:
        pass
    if "v7" in kind:
        # 64 MiB physical VMEM per TensorCore, 2 TCs/chip.
        return dict(block_rows=512, block_k=1024, vmem_budget=48 << 20,
                    two_tc=True)
    if "v6" in kind:
        return dict(block_rows=1024, block_k=1024, vmem_budget=100 << 20,
                    two_tc=False)
    if "v5" in kind:
        return dict(block_rows=512, block_k=1024, vmem_budget=96 << 20,
                    two_tc=False)
    # Unknown chip: conservative budget that is safe everywhere.
    return dict(block_rows=512, block_k=512, vmem_budget=48 << 20,
                two_tc=False)


def _pick_block_k(d_inner: int, desired: int):
    """Return (block_k, d_inner_padded).

    Prefers 256-aligned chunks (v6e/v7x MXU is 2x256x256), falls back to
    128-aligned, and zero-pads d_inner to an aligned multiple when no aligned
    divisor exists (instead of a huge single full-d_inner chunk)."""
    desired = max(128, desired)
    if d_inner <= desired:
        pad = _round_up(d_inner, 128)
        return pad, pad
    for align in (256, 128):
        c = (desired // align) * align
        while c >= align:
            if d_inner % c == 0:
                return c, d_inner
            c -= align
    c = max(256, (desired // 256) * 256)
    return c, _round_up(d_inner, c)


def _vmem_footprint(block_rows, block_k, d_model, in_sz, w_sz, pre_lnorm):
    """Rough double-buffered working-set size in bytes."""
    x_tile = 2 * block_rows * d_model * in_sz
    o_tile = 2 * block_rows * d_model * in_sz
    w1 = 2 * d_model * block_k * w_sz
    w2 = 2 * block_k * d_model * w_sz
    small = 2 * (block_k + 3 * d_model) * w_sz
    acc = block_rows * d_model * 4
    ln = block_rows * d_model * in_sz if pre_lnorm else 0
    return x_tile + o_tile + w1 + w2 + small + acc + ln


def _ff_kernel(x_ref, w1_ref, b1_ref, w2_ref, b2_ref, g_ref, beta_ref,
               o_ref, acc_ref, *maybe_ln, pre_lnorm: bool, eps: float):
    ln_ref = maybe_ln[0] if pre_lnorm else None
    k = pl.program_id(1)
    nk = pl.num_programs(1)

    def layer_norm_f32(zf):
        mean = jnp.mean(zf, axis=-1, keepdims=True)
        cen = zf - mean
        var = jnp.mean(cen * cen, axis=-1, keepdims=True)
        inv = jax.lax.rsqrt(var + eps)
        return (cen * inv * g_ref[...].astype(jnp.float32)
                + beta_ref[...].astype(jnp.float32))

    @pl.when(k == 0)
    def _():
        # Fold b2 into the accumulator init (removes an epilogue add).
        acc_ref[...] = jnp.broadcast_to(
            b2_ref[...].astype(jnp.float32), acc_ref.shape)
        if pre_lnorm:
            # Hoist LayerNorm out of the d_inner loop: compute once per row
            # block, cache in the matmul (input) dtype.
            ln_ref[...] = layer_norm_f32(
                x_ref[...].astype(jnp.float32)).astype(ln_ref.dtype)

    core_in = ln_ref[...] if pre_lnorm else x_ref[...]

    # Linear1 chunk + bias + ReLU (MXU, f32 accumulate, native-dtype operands).
    h = jnp.dot(core_in, w1_ref[...], preferred_element_type=jnp.float32)
    h = jnp.maximum(h + b1_ref[...].astype(jnp.float32), 0.0)

    # Accumulate this d_inner chunk's Linear2 contribution into f32 scratch.
    acc_ref[...] += jnp.dot(h.astype(w2_ref.dtype), w2_ref[...],
                            preferred_element_type=jnp.float32)

    @pl.when(k == nk - 1)
    def _():
        core = acc_ref[...]                       # b2 already folded in
        xf = x_ref[...].astype(jnp.float32)
        if pre_lnorm:
            o_ref[...] = (core + xf).astype(o_ref.dtype)
        else:
            o_ref[...] = layer_norm_f32(xf + core).astype(o_ref.dtype)


def positionwise_ff(inp, params, *, pre_lnorm=False, eps=1e-5,
                    block_rows=None, block_k=None):
    """inp: (seq, batch, d_model) -> (seq, batch, d_model)."""
    w1, b1, w2, b2, gamma, beta = params
    d_model = inp.shape[-1]
    d_inner = w1.shape[-1]
    b1 = b1.reshape(1, -1)
    b2 = b2.reshape(1, -1)
    gamma = gamma.reshape(1, -1)
    beta = beta.reshape(1, -1)

    cfg = _device_defaults()
    if block_rows is None:
        block_rows = cfg["block_rows"]
    if block_k is None:
        block_k = cfg["block_k"]
    vmem_budget = cfg["vmem_budget"]

    x2d = inp.reshape(-1, d_model)                    # [N, d_model]
    n_rows = x2d.shape[0]

    # Dtype-aware row tile (multiple of the sublane packing factor).
    mult = _sublane_multiple(inp.dtype)
    block_rows = max(mult, _round_up(min(block_rows, _round_up(n_rows, mult)),
                                     mult))

    # v7x: make sure both TensorCores get a row block for small inputs.
    if cfg["two_tc"] and _round_up(n_rows, mult) <= block_rows \
            and block_rows >= 2 * mult:
        block_rows = max(mult, _round_up(block_rows // 2, mult))

    block_k, d_inner_pad = _pick_block_k(d_inner, block_k)

    in_sz = jnp.dtype(inp.dtype).itemsize
    w_sz = jnp.dtype(w1.dtype).itemsize

    # Shrink tiles until the double-buffered working set fits the VMEM budget.
    while _vmem_footprint(block_rows, block_k, d_model, in_sz, w_sz,
                          pre_lnorm) > vmem_budget:
        if (block_k > 512 and (block_k // 2) % 128 == 0
                and d_inner_pad % (block_k // 2) == 0):
            block_k //= 2
        elif block_rows > max(mult, 256):
            block_rows = _round_up(block_rows // 2, mult)
        elif (block_k > 128 and (block_k // 2) % 128 == 0
                and d_inner_pad % (block_k // 2) == 0):
            block_k //= 2
        elif block_rows > mult:
            block_rows = _round_up(block_rows // 2, mult)
        else:
            break

    # Pad rows (ragged seq*batch) and d_inner (MXU/VMEM-friendly chunks).
    n_pad = _round_up(n_rows, block_rows)
    if n_pad != n_rows:
        x2d = jnp.pad(x2d, ((0, n_pad - n_rows), (0, 0)))
    if d_inner_pad != d_inner:
        w1 = jnp.pad(w1, ((0, 0), (0, d_inner_pad - d_inner)))
        b1 = jnp.pad(b1, ((0, 0), (0, d_inner_pad - d_inner)))
        w2 = jnp.pad(w2, ((0, d_inner_pad - d_inner), (0, 0)))

    n_row_blocks = n_pad // block_rows
    n_k_blocks = d_inner_pad // block_k
    grid = (n_row_blocks, n_k_blocks)                 # reduction axis last

    kernel = functools.partial(_ff_kernel, pre_lnorm=pre_lnorm, eps=eps)

    # Cost estimate kept in sync with the tuned tiling (weights re-streamed
    # once per row block).
    cost = pl.CostEstimate(
        flops=4 * n_pad * d_model * d_inner_pad,      # two matmuls
        transcendentals=n_pad,                        # one rsqrt per row
        bytes_accessed=(2 * n_pad * d_model * in_sz
                        + n_row_blocks * (w1.size + w2.size) * w_sz),
    )

    scratch_shapes = [pltpu.VMEM((block_rows, d_model), jnp.float32)]
    if pre_lnorm:
        scratch_shapes.append(pltpu.VMEM((block_rows, d_model), inp.dtype))

    out2d = pl.pallas_call(
        kernel,
        out_shape=jax.ShapeDtypeStruct((n_pad, d_model), inp.dtype),
        grid_spec=pltpu.PrefetchScalarGridSpec(
            num_scalar_prefetch=0,
            grid=grid,
            in_specs=[
                # x tile: block of rows, full d_model (resident across k)
                pl.BlockSpec((block_rows, d_model), lambda i, k: (i, 0)),
                # w1 chunk: [d_model, block_k]
                pl.BlockSpec((d_model, block_k), lambda i, k: (0, k)),
                # b1 chunk
                pl.BlockSpec((1, block_k), lambda i, k: (0, k)),
                # w2 chunk: [block_k, d_model]
                pl.BlockSpec((block_k, d_model), lambda i, k: (k, 0)),
                # b2 / gamma / beta: constant small blocks
                pl.BlockSpec((1, d_model), lambda i, k: (0, 0)),
                pl.BlockSpec((1, d_model), lambda i, k: (0, 0)),
                pl.BlockSpec((1, d_model), lambda i, k: (0, 0)),
            ],
            # Same output block across the reduction axis -> stays resident.
            out_specs=pl.BlockSpec((block_rows, d_model), lambda i, k: (i, 0)),
            scratch_shapes=scratch_shapes,
        ),
        compiler_params=pltpu.CompilerParams(
            dimension_semantics=("parallel", "arbitrary"),
            vmem_limit_bytes=int(vmem_budget),
        ),
        cost_estimate=cost,
    )(x2d, w1, b1, w2, b2, gamma, beta)

    if n_pad != n_rows:
        out2d = out2d[:n_rows]
    return out2d.reshape(inp.shape)


def init_params(key, d_model, d_inner, dtype=jnp.float32):
    k1, k2, k3, k4 = jax.random.split(key, 4)
    lim1 = 1.0 / (d_model ** 0.5)
    lim2 = 1.0 / (d_inner ** 0.5)
    w1 = jax.random.uniform(k1, (d_model, d_inner), dtype, -lim1, lim1)
    b1 = jax.random.uniform(k2, (1, d_inner), dtype, -lim1, lim1)
    w2 = jax.random.uniform(k3, (d_inner, d_model), dtype, -lim2, lim2)
    b2 = jax.random.uniform(k4, (1, d_model), dtype, -lim2, lim2)
    gamma = jnp.ones((1, d_model), dtype)
    beta = jnp.zeros((1, d_model), dtype)
    return (w1, b1, w2, b2, gamma, beta)


def reference_ff(inp, params, *, pre_lnorm=False, eps=1e-5):
    w1, b1, w2, b2, gamma, beta = params

    def ln(z):
        mean = jnp.mean(z, axis=-1, keepdims=True)
        var = jnp.mean((z - mean) ** 2, axis=-1, keepdims=True)
        return (z - mean) * jax.lax.rsqrt(var + eps) * gamma[0] + beta[0]

    core_in = ln(inp) if pre_lnorm else inp
    h = jnp.maximum(core_in @ w1 + b1[0], 0.0)
    core = h @ w2 + b2[0]
    return core + inp if pre_lnorm else ln(inp + core)


if __name__ == "__main__":
    key = jax.random.PRNGKey(0)
    k_x, k_p = jax.random.split(key)

    seq, batch, d_model, d_inner = 8, 2, 128, 256
    x = jax.random.normal(k_x, (seq, batch, d_model), jnp.float32)
    params = init_params(k_p, d_model, d_inner)

    # post-lnorm, block_k=128 -> exercises the 2-step d_inner reduction with
    # b2 folded into the accumulator init.
    out = jax.block_until_ready(
        positionwise_ff(x, params, pre_lnorm=False, block_k=128))
    ref = reference_ff(x, params, pre_lnorm=False)
    assert jnp.allclose(out, ref, atol=1e-4, rtol=1e-4), "post-lnorm mismatch"

    # pre-lnorm path (hoisted LayerNorm cached in VMEM scratch)
    out_pre = jax.block_until_ready(
        positionwise_ff(x, params, pre_lnorm=True, block_k=128))
    ref_pre = reference_ff(x, params, pre_lnorm=True)
    assert jnp.allclose(out_pre, ref_pre, atol=1e-4, rtol=1e-4), "pre-lnorm mismatch"

    # ragged seq*batch + non-aligned d_inner (exercises row padding and the
    # zero-padded d_inner chunking path: 320 -> 512, block_k=256).
    params_odd = init_params(k_p, d_model, 320)
    x_ragged = jax.random.normal(k_x, (5, 3, d_model), jnp.float32)
    out_r = jax.block_until_ready(
        positionwise_ff(x_ragged, params_odd, pre_lnorm=False, block_k=256))
    ref_r = reference_ff(x_ragged, params_odd, pre_lnorm=False)
    assert jnp.allclose(out_r, ref_r, atol=1e-4, rtol=1e-4), "ragged mismatch"

    # bf16 path (native-dtype MXU operands, f32 LN stats, device defaults)
    xb = x.astype(jnp.bfloat16)
    params_b = tuple(p.astype(jnp.bfloat16) for p in params)
    out_b = jax.block_until_ready(
        positionwise_ff(xb, params_b, pre_lnorm=True))
    assert bool(jnp.all(jnp.isfinite(out_b.astype(jnp.float32)))), "bf16 non-finite"

    print("KERNEL_OK")
</pallas_src>

<mosaic_0001>
module attributes {stable_mosaic.version = 11 : i64} {
  func.func @_ff_kernel(%arg0: i32, %arg1: i32, %arg2: memref<16x128xf32, #tpu.memory_space<vmem>>, %arg3: memref<128x128xf32, #tpu.memory_space<vmem>>, %arg4: memref<1x128xf32, #tpu.memory_space<vmem>>, %arg5: memref<128x128xf32, #tpu.memory_space<vmem>>, %arg6: memref<1x128xf32, #tpu.memory_space<vmem>>, %arg7: memref<1x128xf32, #tpu.memory_space<vmem>>, %arg8: memref<1x128xf32, #tpu.memory_space<vmem>>, %arg9: memref<16x128xf32, #tpu.memory_space<vmem>>, %arg10: memref<16x128xf32, #tpu.memory_space<vmem>>) attributes {dimension_semantics = [#tpu.dimension_semantics<parallel>, #tpu.dimension_semantics<arbitrary>], iteration_bounds = array<i64: 1, 2>, scalar_prefetch = 0 : i64, scratch_operands = 1 : i64, tpu.core_type = #tpu.core_type<tc>, window_params = [{transform_indices = @transform_0, window_bounds = array<i64: 16, 128>}, {transform_indices = @transform_1, window_bounds = array<i64: 128, 128>}, {transform_indices = @transform_2, window_bounds = array<i64: 1, 128>}, {transform_indices = @transform_3, window_bounds = array<i64: 128, 128>}, {pipeline_mode = #tpu.pipeline_mode<synchronous>, transform_indices = @transform_4, window_bounds = array<i64: 1, 128>}, {pipeline_mode = #tpu.pipeline_mode<synchronous>, transform_indices = @transform_5, window_bounds = array<i64: 1, 128>}, {pipeline_mode = #tpu.pipeline_mode<synchronous>, transform_indices = @transform_6, window_bounds = array<i64: 1, 128>}, {transform_indices = @transform_7, window_bounds = array<i64: 16, 128>}]} {
    %c0_i32 = arith.constant 0 : i32
    %0 = arith.cmpi eq, %arg1, %c0_i32 : i32
    %1 = arith.extui %0 : i1 to i32
    %c0_i32_0 = arith.constant 0 : i32
    %2 = arith.cmpi ne, %1, %c0_i32_0 : i32
    scf.if %2 {
      %c0_15 = arith.constant 0 : index
      %c0_16 = arith.constant 0 : index
      %19 = vector.load %arg6[%c0_15, %c0_16] : memref<1x128xf32, #tpu.memory_space<vmem>>, vector<1x128xf32>
      %20 = vector.shape_cast %19 : vector<1x128xf32> to vector<1x128xf32>
      %21 = vector.broadcast %20 : vector<1x128xf32> to vector<16x128xf32>
      %c0_17 = arith.constant 0 : index
      %c0_18 = arith.constant 0 : index
      %22 = vector.load %arg10[%c0_17, %c0_18] : memref<16x128xf32, #tpu.memory_space<vmem>>, vector<16x128xf32>
      tpu.vector_store %arg10[%c0_17, %c0_18], %21 {strides = array<i32>} : memref<16x128xf32, #tpu.memory_space<vmem>>, vector<16x128xf32>,
    } else {
    }
    %c0 = arith.constant 0 : index
    %c0_1 = arith.constant 0 : index
    %3 = vector.load %arg2[%c0, %c0_1] : memref<16x128xf32, #tpu.memory_space<vmem>>, vector<16x128xf32>
    %c0_2 = arith.constant 0 : index
    %c0_3 = arith.constant 0 : index
    %4 = vector.load %arg3[%c0_2, %c0_3] : memref<128x128xf32, #tpu.memory_space<vmem>>, vector<128x128xf32>
    %cst = arith.constant dense<0.000000e+00> : vector<16x128xf32>
    %5 = tpu.matmul %3, %4, %cst {dimension_numbers = #tpu.dot_dimension_numbers<[1], [0], [0], [1], [0, 0, 1, 1], [], []>} : vector<16x128xf32>, vector<128x128xf32>, vector<16x128xf32> -> vector<16x128xf32>
    %c0_4 = arith.constant 0 : index
    %c0_5 = arith.constant 0 : index
    %6 = vector.load %arg4[%c0_4, %c0_5] : memref<1x128xf32, #tpu.memory_space<vmem>>, vector<1x128xf32>
    %7 = vector.broadcast %6 : vector<1x128xf32> to vector<16x128xf32>
    %8 = arith.addf %5, %7 : vector<16x128xf32>
    %cst_6 = arith.constant 0.000000e+00 : f32
    %9 = vector.broadcast %cst_6 : f32 to vector<16x128xf32>
    %10 = arith.maximumf %8, %9 : vector<16x128xf32>
    %c0_7 = arith.constant 0 : index
    %c0_8 = arith.constant 0 : index
    %11 = vector.load %arg10[%c0_7, %c0_8] : memref<16x128xf32, #tpu.memory_space<vmem>>, vector<16x128xf32>
    %c0_9 = arith.constant 0 : index
    %c0_10 = arith.constant 0 : index
    %12 = vector.load %arg5[%c0_9, %c0_10] : memref<128x128xf32, #tpu.memory_space<vmem>>, vector<128x128xf32>
    %cst_11 = arith.constant dense<0.000000e+00> : vector<16x128xf32>
    %13 = tpu.matmul %10, %12, %cst_11 {dimension_numbers = #tpu.dot_dimension_numbers<[1], [0], [0], [1], [0, 0, 1, 1], [], []>} : vector<16x128xf32>, vector<128x128xf32>, vector<16x128xf32> -> vector<16x128xf32>
    %14 = arith.addf %11, %13 : vector<16x128xf32>
    %c0_12 = arith.constant 0 : index
    %c0_13 = arith.constant 0 : index
    %15 = vector.load %arg10[%c0_12, %c0_13] : memref<16x128xf32, #tpu.memory_space<vmem>>, vector<16x128xf32>
    tpu.vector_store %arg10[%c0_12, %c0_13], %14 {strides = array<i32>} : memref<16x128xf32, #tpu.memory_space<vmem>>, vector<16x128xf32>,
    %c1_i32 = arith.constant 1 : i32
    %16 = arith.cmpi eq, %arg1, %c1_i32 : i32
    %17 = arith.extui %16 : i1 to i32
    %c0_i32_14 = arith.constant 0 : i32
    %18 = arith.cmpi ne, %17, %c0_i32_14 : i32
    scf.if %18 {
      %c0_15 = arith.constant 0 : index
      %c0_16 = arith.constant 0 : index
      %19 = vector.load %arg10[%c0_15, %c0_16] : memref<16x128xf32, #tpu.memory_space<vmem>>, vector<16x128xf32>
      %c0_17 = arith.constant 0 : index
      %c0_18 = arith.constant 0 : index
      %20 = vector.load %arg2[%c0_17, %c0_18] : memref<16x128xf32, #tpu.memory_space<vmem>>, vector<16x128xf32>
      %21 = arith.addf %20, %19 : vector<16x128xf32>
      %cst_19 = arith.constant dense<0.000000e+00> : vector<16xf32>
      %22 = vector.multi_reduction <add>, %21, %cst_19 [1] : vector<16x128xf32> to vector<16xf32>
      %23 = vector.shape_cast %22 : vector<16xf32> to vector<16x1xf32>
      %cst_20 = arith.constant 1.280000e+02 : f32
      %24 = vector.broadcast %cst_20 : f32 to vector<16x1xf32>
      %25 = arith.divf %23, %24 : vector<16x1xf32>
      %26 = vector.broadcast %25 : vector<16x1xf32> to vector<16x128xf32>
      %27 = arith.subf %21, %26 : vector<16x128xf32>
      %28 = arith.mulf %27, %27 : vector<16x128xf32>
      %cst_21 = arith.constant dense<0.000000e+00> : vector<16xf32>
      %29 = vector.multi_reduction <add>, %28, %cst_21 [1] : vector<16x128xf32> to vector<16xf32>
      %30 = vector.shape_cast %29 : vector<16xf32> to vector<16x1xf32>
      %cst_22 = arith.constant 1.280000e+02 : f32
      %31 = vector.broadcast %cst_22 : f32 to vector<16x1xf32>
      %32 = arith.divf %30, %31 : vector<16x1xf32>
      %cst_23 = arith.constant 9.99999974E-6 : f32
      %33 = vector.broadcast %cst_23 : f32 to vector<16x1xf32>
      %34 = arith.addf %32, %33 : vector<16x1xf32>
      %35 = math.rsqrt %34 : vector<16x1xf32>
      %36 = vector.broadcast %35 : vector<16x1xf32> to vector<16x128xf32>
      %37 = arith.mulf %27, %36 : vector<16x128xf32>
      %c0_24 = arith.constant 0 : index
      %c0_25 = arith.constant 0 : index
      %38 = vector.load %arg7[%c0_24, %c0_25] : memref<1x128xf32, #tpu.memory_space<vmem>>, vector<1x128xf32>
      %39 = vector.broadcast %38 : vector<1x128xf32> to vector<16x128xf32>
      %40 = arith.mulf %37, %39 : vector<16x128xf32>
      %c0_26 = arith.constant 0 : index
      %c0_27 = arith.constant 0 : index
      %41 = vector.load %arg8[%c0_26, %c0_27] : memref<1x128xf32, #tpu.memory_space<vmem>>, vector<1x128xf32>
      %42 = vector.broadcast %41 : vector<1x128xf32> to vector<16x128xf32>
      %43 = arith.addf %40, %42 : vector<16x128xf32>
      %c0_28 = arith.constant 0 : index
      %c0_29 = arith.constant 0 : index
      %44 = vector.load %arg9[%c0_28, %c0_29] : memref<16x128xf32, #tpu.memory_space<vmem>>, vector<16x128xf32>
      tpu.vector_store %arg9[%c0_28, %c0_29], %43 {strides = array<i32>} : memref<16x128xf32, #tpu.memory_space<vmem>>, vector<16x128xf32>,
    } else {
    }
    return
  }
  func.func @transform_0(%arg0: i32, %arg1: i32) -> (i32, i32) {
    %c0_i32 = arith.constant 0 : i32
    %c0_i32_0 = arith.constant 0 : i32
    return %arg0, %c0_i32 : i32, i32
  }
  func.func @transform_1(%arg0: i32, %arg1: i32) -> (i32, i32) {
    %c0_i32 = arith.constant 0 : i32
    %c0_i32_0 = arith.constant 0 : i32
    return %c0_i32, %arg1 : i32, i32
  }
  func.func @transform_2(%arg0: i32, %arg1: i32) -> (i32, i32) {
    %c0_i32 = arith.constant 0 : i32
    %c0_i32_0 = arith.constant 0 : i32
    return %c0_i32, %arg1 : i32, i32
  }
  func.func @transform_3(%arg0: i32, %arg1: i32) -> (i32, i32) {
    %c0_i32 = arith.constant 0 : i32
    %c0_i32_0 = arith.constant 0 : i32
    return %arg1, %c0_i32 : i32, i32
  }
  func.func @transform_4(%arg0: i32, %arg1: i32) -> (i32, i32) {
    %c0_i32 = arith.constant 0 : i32
    %c0_i32_0 = arith.constant 0 : i32
    %c0_i32_1 = arith.constant 0 : i32
    return %c0_i32, %c0_i32_0 : i32, i32
  }
  func.func @transform_5(%arg0: i32, %arg1: i32) -> (i32, i32) {
    %c0_i32 = arith.constant 0 : i32
    %c0_i32_0 = arith.constant 0 : i32
    %c0_i32_1 = arith.constant 0 : i32
    return %c0_i32, %c0_i32_0 : i32, i32
  }
  func.func @transform_6(%arg0: i32, %arg1: i32) -> (i32, i32) {
    %c0_i32 = arith.constant 0 : i32
    %c0_i32_0 = arith.constant 0 : i32
    %c0_i32_1 = arith.constant 0 : i32
    return %c0_i32, %c0_i32_0 : i32, i32
  }
  func.func @transform_7(%arg0: i32, %arg1: i32) -> (i32, i32) {
    %c0_i32 = arith.constant 0 : i32
    %c0_i32_0 = arith.constant 0 : i32
    return %arg0, %c0_i32 : i32, i32
  }
}

</mosaic_0001>

<llo_original>
// kernel: tpu_custom_call.1
$region0: #{tpu_custom_call.1}
  #allocation0 [shape = 'u32[]', space=smem, size = 0x4, offset = 0x4, fixed_abs, tag = 'smem constant byte address 0x4 - core index']
  #allocation1 [shape = 'u32[72,128]{1,0:T(1,128)}', space=vmem, size = 0x9000, scoped, tag = 'internal scratch']
  #allocation2 [shape = 'f32[16,128]{1,0:T(8,128)}', space=vmem, size = 0x2000, scoped, tag = 'scratch operand']
  %s0 = inlined_call_operand.hbm [shape: f32[16,128], index: 0, kind: input, shape index: {}]
  %s1 = inlined_call_operand.hbm [shape: f32[128,256], index: 1, kind: input, shape index: {}]
  %s2 = inlined_call_operand.hbm [shape: f32[1,256], index: 2, kind: input, shape index: {}]
  %s3 = inlined_call_operand.hbm [shape: f32[256,128], index: 3, kind: input, shape index: {}]
  %s4 = inlined_call_operand.vmem [shape: f32[1,128], index: 4, kind: input, shape index: {}]
  %s5 = inlined_call_operand.vmem [shape: f32[1,128], index: 5, kind: input, shape index: {}]
  %s6 = inlined_call_operand.vmem [shape: f32[1,128], index: 6, kind: input, shape index: {}]
  %s7 = inlined_call_operand.hbm [shape: f32[16,128], index: 7, kind: output, shape index: {}]
  %s8 = sld [smem:[#allocation0]]
  $region85: #{tpu_custom_call.1} parent=0
    _
  %s10 = ssub.s32 1, %s8
  %s11 = scalar_select 0, %s10, %s8
  $region1: #{tpu_custom_call.1} parent=0
    #allocation3 [shape = 'u8[8192]{0}', space=vmem, size = 0x2000, scoped, tag = 'input window, operand 0, single buffered']
    #allocation4 [shape = 's32[2]{0}', space=sflag, size = 0x8, scoped, tag = 'scoped memory for tpu_custom_call.1']
    #allocation5 [shape = 's32[2]{0}', space=sflag, size = 0x8, scoped, tag = 'scoped memory for tpu_custom_call.1']
    #allocation6 [shape = 'u8[131072]{0}', space=vmem, size = 0x20000, scoped, tag = 'input window, operand 1']
    #allocation7 [shape = 's32[2]{0}', space=sflag, size = 0x8, scoped, tag = 'scoped memory for tpu_custom_call.1']
    #allocation8 [shape = 'u8[1024]{0}', space=vmem, size = 0x400, scoped, tag = 'input window, operand 2']
    #allocation9 [shape = 'u8[131072]{0}', space=vmem, size = 0x20000, scoped, tag = 'input window, operand 3']
    #allocation10 [shape = 's32[2]{0}', space=sflag, size = 0x8, scoped, tag = 'scoped memory for tpu_custom_call.1']
    #allocation11 [shape = 'u8[8192]{0}', space=vmem, size = 0x2000, scoped, tag = 'output window, operand 0, single buffered']
    %12 = vsyncpa [#allocation4], 0
    %13 = vsyncpa [#allocation7], 0
    %s14 = scalar_lea.sflag [#allocation7], 1
    %15 = vsyncpa %s14, 0
    %16 = vsyncpa [#allocation10], 0
    %s17 = scalar_lea.sflag [#allocation10], 1
    %18 = vsyncpa %s17, 0
    %19 = vsyncpa [#allocation5], 0
    loop: start=0, step=1, limit=4
    $region2: #{tpu_custom_call.1} parent=1 // loop_pre_header
      _
    $region3: #{tpu_custom_call.1} parent=1 // loop_header
      %s21 = sphi 0, %s25
      %p22 = scmp.ge.s32.totalorder %s21, 4
      %s28 = sphi 0, %s40
      %s29 = sphi 0, %s36
      %s30 = sphi 0, %s28
      %s31 = sphi 0, %s29
      %s32 = sphi 0, %s30
      %s33 = sphi 0, %s31
      %s43 = sphi 0, %s45
      %s46 = sphi 0, %s43
      %s47 = sphi 0, %s46
      %s63 = sphi 0, %s47
      %s69 = sphi 0, %s71
      %s72 = sphi 0, %s69
      %s73 = sphi 0, %s72
      %s89 = sphi 0, %s73
      %s95 = sphi 0, %s97
      %s98 = sphi 0, %s95
      %s99 = sphi 0, %s98
      %s115 = sphi 0, %s99
      %s121 = sphi 0, %s123
      %s124 = sphi 0, %s121
      %s125 = sphi 0, %s124
      %s141 = sphi 0, %s125
      %s145 = sphi 0, %s145
      %s147 = sphi 0, %s145
      %s148 = sphi 0, %s147
      %s162 = sphi 0, %s148
      %s166 = sphi 0, %s166
      %s168 = sphi 0, %s166
      %s169 = sphi 0, %s168
      %s183 = sphi 0, %s169
      %s187 = sphi 0, %s187
      %s189 = sphi 0, %s187
      %s190 = sphi 0, %s189
      %s204 = sphi 0, %s190
      %s210 = sphi 0, %s212
      %s213 = sphi 0, %s210
      %s214 = sphi 0, %s213
      %s230 = sphi 0, %s214
    $region4: #{tpu_custom_call.1} parent=1 // loop_header_branch
      %24 = sbr.rel (%p22) target = $region8
    $region5: #{tpu_custom_call.1} parent=1 // loop_body
      %s26 = ssub.s32 %s21, 1
      %s27 = ssub.s32 %s21, 2
      %s34 = sadd.s32 1, %s29
      %p35 = scmp.ge.s32.totalorder %s34, 2
      %s36 = scalar_select %p35, 0, %s34
      %s37 = sadd.s32 1, %s28
      %s38 = scalar_select %p35, %s37, %s28
      %p39 = scmp.ge.s32.totalorder %s38, 1
      %s40 = scalar_select %p39, 0, %s38
      %s41 = ssub.s32 %s28, %s40
      %p42 = scmp.eq.s32.totalorder %s41, 0
      %s44 = sadd.s32 %s43, 1
      %s45 = scalar_select %p42, %s43, %s44
      %p48 = pneg %p42
      %p49 = scmp.eq.s32.totalorder %s21, 1
      %p50 = por %p48, %p49
      %p51 = scmp.ne.s32.totalorder %s43, %s46
      %p52 = scmp.eq.s32.totalorder %s21, 0
      %p53 = por %p51, %p52
      %p54 = scmp.ne.s32.totalorder %s43, %s46
      %p55 = scmp.eq.s32.totalorder %s26, 1
      %p56 = por %p54, %p55
      %p57 = scmp.ne.s32.totalorder %s46, %s47
      %p58 = scmp.eq.s32.totalorder %s26, 0
      %p59 = por %p57, %p58
      %p60 = scmp.ne.s32.totalorder %s46, %s47
      %p61 = scmp.eq.s32.totalorder %s27, 1
      %p62 = por %p60, %p61
      %p64 = scmp.ne.s32.totalorder %s47, %s63
      %p65 = scmp.eq.s32.totalorder %s27, 0
      %p66 = por %p64, %p65
      %s67 = ssub.s32 %s29, %s36
      %p68 = scmp.eq.s32.totalorder %s67, 0
      %s70 = sadd.s32 %s69, 1
      %s71 = scalar_select %p68, %s69, %s70
      %p74 = pneg %p68
      %p75 = scmp.eq.s32.totalorder %s21, 1
      %p76 = por %p74, %p75
      %p77 = scmp.ne.s32.totalorder %s69, %s72
      %p78 = scmp.eq.s32.totalorder %s21, 0
      %p79 = por %p77, %p78
      %p80 = scmp.ne.s32.totalorder %s69, %s72
      %p81 = scmp.eq.s32.totalorder %s26, 1
      %p82 = por %p80, %p81
      %p83 = scmp.ne.s32.totalorder %s72, %s73
      %p84 = scmp.eq.s32.totalorder %s26, 0
      %p85 = por %p83, %p84
      %p86 = scmp.ne.s32.totalorder %s72, %s73
      %p87 = scmp.eq.s32.totalorder %s27, 1
      %p88 = por %p86, %p87
      %p90 = scmp.ne.s32.totalorder %s73, %s89
      %p91 = scmp.eq.s32.totalorder %s27, 0
      %p92 = por %p90, %p91
      %s93 = ssub.s32 %s29, %s36
      %p94 = scmp.eq.s32.totalorder %s93, 0
      %s96 = sadd.s32 %s95, 1
      %s97 = scalar_select %p94, %s95, %s96
      %p100 = pneg %p94
      %p101 = scmp.eq.s32.totalorder %s21, 1
      %p102 = por %p100, %p101
      %p103 = scmp.ne.s32.totalorder %s95, %s98
      %p104 = scmp.eq.s32.totalorder %s21, 0
      %p105 = por %p103, %p104
      %p106 = scmp.ne.s32.totalorder %s95, %s98
      %p107 = scmp.eq.s32.totalorder %s26, 1
      %p108 = por %p106, %p107
      %p109 = scmp.ne.s32.totalorder %s98, %s99
      %p110 = scmp.eq.s32.totalorder %s26, 0
      %p111 = por %p109, %p110
      %p112 = scmp.ne.s32.totalorder %s98, %s99
      %p113 = scmp.eq.s32.totalorder %s27, 1
      %p114 = por %p112, %p113
      %p116 = scmp.ne.s32.totalorder %s99, %s115
      %p117 = scmp.eq.s32.totalorder %s27, 0
      %p118 = por %p116, %p117
      %s119 = ssub.s32 %s29, %s36
      %p120 = scmp.eq.s32.totalorder %s119, 0
      %s122 = sadd.s32 %s121, 1
      %s123 = scalar_select %p120, %s121, %s122
      %p126 = pneg %p120
      %p127 = scmp.eq.s32.totalorder %s21, 1
      %p128 = por %p126, %p127
      %p129 = scmp.ne.s32.totalorder %s121, %s124
      %p130 = scmp.eq.s32.totalorder %s21, 0
      %p131 = por %p129, %p130
      %p132 = scmp.ne.s32.totalorder %s121, %s124
      %p133 = scmp.eq.s32.totalorder %s26, 1
      %p134 = por %p132, %p133
      %p135 = scmp.ne.s32.totalorder %s124, %s125
      %p136 = scmp.eq.s32.totalorder %s26, 0
      %p137 = por %p135, %p136
      %p138 = scmp.ne.s32.totalorder %s124, %s125
      %p139 = scmp.eq.s32.totalorder %s27, 1
      %p140 = por %p138, %p139
      %p142 = scmp.ne.s32.totalorder %s125, %s141
      %p143 = scmp.eq.s32.totalorder %s27, 0
      %p144 = por %p142, %p143
      %s146 = sadd.s32 %s145, 1
      %p149 = scmp.eq.s32.totalorder %s21, 1
      %p150 = scmp.ne.s32.totalorder %s145, %s147
      %p151 = scmp.eq.s32.totalorder %s21, 0
      %p152 = por %p150, %p151
      %p153 = scmp.ne.s32.totalorder %s145, %s147
      %p154 = scmp.eq.s32.totalorder %s26, 1
      %p155 = por %p153, %p154
      %p156 = scmp.ne.s32.totalorder %s147, %s148
      %p157 = scmp.eq.s32.totalorder %s26, 0
      %p158 = por %p156, %p157
      %p159 = scmp.ne.s32.totalorder %s147, %s148
      %p160 = scmp.eq.s32.totalorder %s27, 1
      %p161 = por %p159, %p160
      %p163 = scmp.ne.s32.totalorder %s148, %s162
      %p164 = scmp.eq.s32.totalorder %s27, 0
      %p165 = por %p163, %p164
      %s167 = sadd.s32 %s166, 1
      %p170 = scmp.eq.s32.totalorder %s21, 1
      %p171 = scmp.ne.s32.totalorder %s166, %s168
      %p172 = scmp.eq.s32.totalorder %s21, 0
      %p173 = por %p171, %p172
      %p174 = scmp.ne.s32.totalorder %s166, %s168
      %p175 = scmp.eq.s32.totalorder %s26, 1
      %p176 = por %p174, %p175
      %p177 = scmp.ne.s32.totalorder %s168, %s169
      %p178 = scmp.eq.s32.totalorder %s26, 0
      %p179 = por %p177, %p178
      %p180 = scmp.ne.s32.totalorder %s168, %s169
      %p181 = scmp.eq.s32.totalorder %s27, 1
      %p182 = por %p180, %p181
      %p184 = scmp.ne.s32.totalorder %s169, %s183
      %p185 = scmp.eq.s32.totalorder %s27, 0
      %p186 = por %p184, %p185
      %s188 = sadd.s32 %s187, 1
      %p191 = scmp.eq.s32.totalorder %s21, 1
      %p192 = scmp.ne.s32.totalorder %s187, %s189
      %p193 = scmp.eq.s32.totalorder %s21, 0
      %p194 = por %p192, %p193
      %p195 = scmp.ne.s32.totalorder %s187, %s189
      %p196 = scmp.eq.s32.totalorder %s26, 1
      %p197 = por %p195, %p196
      %p198 = scmp.ne.s32.totalorder %s189, %s190
      %p199 = scmp.eq.s32.totalorder %s26, 0
      %p200 = por %p198, %p199
      %p201 = scmp.ne.s32.totalorder %s189, %s190
      %p202 = scmp.eq.s32.totalorder %s27, 1
      %p203 = por %p201, %p202
      %p205 = scmp.ne.s32.totalorder %s190, %s204
      %p206 = scmp.eq.s32.totalorder %s27, 0
      %p207 = por %p205, %p206
      %s208 = ssub.s32 %s28, %s40
      %p209 = scmp.eq.s32.totalorder %s208, 0
      %s211 = sadd.s32 %s210, 1
      %s212 = scalar_select %p209, %s210, %s211
      %p215 = pneg %p209
      %p216 = scmp.eq.s32.totalorder %s21, 1
      %p217 = por %p215, %p216
      %p218 = scmp.ne.s32.totalorder %s210, %s213
      %p219 = scmp.eq.s32.totalorder %s21, 0
      %p220 = por %p218, %p219
      %p221 = scmp.ne.s32.totalorder %s210, %s213
      %p222 = scmp.eq.s32.totalorder %s26, 1
      %p223 = por %p221, %p222
      %p224 = scmp.ne.s32.totalorder %s213, %s214
      %p225 = scmp.eq.s32.totalorder %s26, 0
      %p226 = por %p224, %p225
      %p227 = scmp.ne.s32.totalorder %s213, %s214
      %p228 = scmp.eq.s32.totalorder %s27, 1
      %p229 = por %p227, %p228
      %p231 = scmp.ne.s32.totalorder %s214, %s230
      %p232 = scmp.eq.s32.totalorder %s27, 0
      %p233 = por %p231, %p232
      %p234 = scmp.le.s32.totalorder 1, %s21
      %p235 = scmp.lt.s32.totalorder %s21, 3
      %p236 = pnand %p234, %p235
      %p237 = pneg %p236
      // Predicated region
      $region9: #{tpu_custom_call.1} parent=5 // pred_check
        _
      $region10: #{tpu_custom_call.1} parent=5 // pred_check_branch
        %239 = sbr.rel (%p236) target = $region12
      $region11: #{tpu_custom_call.1} parent=5 // pred_region
        %s240 = ssub.s32 %s21, 1
        // Predicated region
        $region13: #{tpu_custom_call.1} parent=11 // pred_check
          %p241 = pneg %p59
        $region14: #{tpu_custom_call.1} parent=11 // pred_check_branch
          %243 = sbr.rel (%p241) target = $region16
        $region15: #{tpu_custom_call.1} parent=11 // pred_region
          %s244 = smul.u32 2, %s30
          %246 = vsyncadd [#allocation4], 0
          %s247 = smul.addr %s244, 8
          %s248 = scalar_lea.hbm %s0, %s247
          %s249 = sshll.u32 %s248, 4
          %s250 = int_to_ptr.hbm [resolvable:$true] %s249
          %s251 = sshll.u32 [#allocation3], 4
          %s252 = int_to_ptr.vmem [resolvable:$true] %s251
          %257 = dma.hbm_to_vmem [thread:$0]  %s250, 256, %s252, [#allocation4], 128, 128, 8
        $region16: #{tpu_custom_call.1} parent=11 // pred_fallthru
          _
        // Predicated region
        $region17: #{tpu_custom_call.1} parent=11 // pred_check
          %p258 = pneg %p158
        $region18: #{tpu_custom_call.1} parent=11 // pred_check_branch
          %260 = sbr.rel (%p258) target = $region20
        $region19: #{tpu_custom_call.1} parent=11 // pred_region
          _
        $region20: #{tpu_custom_call.1} parent=11 // pred_fallthru
          _
        // Predicated region
        $region21: #{tpu_custom_call.1} parent=11 // pred_check
          %p261 = pneg %p179
        $region22: #{tpu_custom_call.1} parent=11 // pred_check_branch
          %263 = sbr.rel (%p261) target = $region24
        $region23: #{tpu_custom_call.1} parent=11 // pred_region
          _
        $region24: #{tpu_custom_call.1} parent=11 // pred_fallthru
          _
        // Predicated region
        $region25: #{tpu_custom_call.1} parent=11 // pred_check
          %p264 = pneg %p200
        $region26: #{tpu_custom_call.1} parent=11 // pred_check_branch
          %266 = sbr.rel (%p264) target = $region28
        $region27: #{tpu_custom_call.1} parent=11 // pred_region
          _
        $region28: #{tpu_custom_call.1} parent=11 // pred_fallthru
          _
      $region12: #{tpu_custom_call.1} parent=5 // pred_fallthru
        _
      %p267 = scmp.lt.s32.totalorder %s21, 2
      // Predicated region
      $region29: #{tpu_custom_call.1} parent=5 // pred_check
        %p268 = pneg %p267
      $region30: #{tpu_custom_call.1} parent=5 // pred_check_branch
        %270 = sbr.rel (%p268) target = $region32
      $region31: #{tpu_custom_call.1} parent=5 // pred_region
        // Predicated region
        $region33: #{tpu_custom_call.1} parent=31 // pred_check
          %p271 = pneg %p79
        $region34: #{tpu_custom_call.1} parent=31 // pred_check_branch
          %273 = sbr.rel (%p271) target = $region36
        $region35: #{tpu_custom_call.1} parent=31 // pred_region
          %s274 = sand.u32 %s21, 1
          %s275 = scalar_lea.sflag [#allocation7], %s274
          %s276 = sand.u32 %s69, 1
          %s277 = smul.addr %s276, 128
          %s278 = scalar_lea.vmem [#allocation6], %s277
          %280 = vsyncadd %s275, 0
          %s281 = smul.addr %s29, 8
          %s282 = scalar_lea.hbm %s1, %s281
          %s283 = sshll.u32 %s282, 4
          %s284 = int_to_ptr.hbm [resolvable:$true] %s283
          %s285 = sshll.u32 %s278, 4
          %s286 = int_to_ptr.vmem [resolvable:$true] %s285
          %291 = dma.hbm_to_vmem [thread:$0]  %s284, 2048, %s286, %s275, 256, 128, 8
        $region36: #{tpu_custom_call.1} parent=31 // pred_fallthru
          _
        // Predicated region
        $region37: #{tpu_custom_call.1} parent=31 // pred_check
          %p292 = pneg %p105
        $region38: #{tpu_custom_call.1} parent=31 // pred_check_branch
          %294 = sbr.rel (%p292) target = $region40
        $region39: #{tpu_custom_call.1} parent=31 // pred_region
          %s295 = sand.u32 %s21, 1
          %s296 = scalar_lea.sflag [#allocation7], %s295
          %s297 = sand.u32 %s95, 1
          %s298 = scalar_lea.vmem [#allocation8], %s297
          %300 = vsyncadd %s296, 0
          %s301 = scalar_lea.hbm %s2, %s29
          %s303 = sshll.u32 %s301, 4
          %s304 = int_to_ptr.hbm [resolvable:$true] %s303
          %s305 = sshll.u32 %s298, 4
          %s306 = int_to_ptr.vmem [resolvable:$true] %s305
          %308 = dma.hbm_to_vmem [thread:$0]  %s304, 16, %s306, %s296
        $region40: #{tpu_custom_call.1} parent=31 // pred_fallthru
          _
        // Predicated region
        $region41: #{tpu_custom_call.1} parent=31 // pred_check
          %p309 = pneg %p131
        $region42: #{tpu_custom_call.1} parent=31 // pred_check_branch
          %311 = sbr.rel (%p309) target = $region44
        $region43: #{tpu_custom_call.1} parent=31 // pred_region
          %s312 = sand.u32 %s121, 1
          %s313 = scalar_lea.sflag [#allocation10], %s312
          %s314 = sand.u32 %s121, 1
          %s315 = smul.addr %s314, 128
          %s316 = scalar_lea.vmem [#allocation9], %s315
          %s317 = smul.u32 16, %s29
          %319 = vsyncadd %s313, 0
          %s320 = smul.addr %s317, 8
          %s321 = scalar_lea.hbm %s3, %s320
          %s322 = sshll.u32 %s321, 4
          %s323 = int_to_ptr.hbm [resolvable:$true] %s322
          %s324 = sshll.u32 %s316, 4
          %s325 = int_to_ptr.vmem [resolvable:$true] %s324
          %330 = dma.hbm_to_vmem [thread:$0]  %s323, 2048, %s325, %s313, 128, 128, 8
        $region44: #{tpu_custom_call.1} parent=31 // pred_fallthru
          _
      $region32: #{tpu_custom_call.1} parent=5 // pred_fallthru
        _
      %p331 = scmp.le.s32.totalorder 1, %s21
      %p332 = scmp.lt.s32.totalorder %s21, 3
      %p333 = pnand %p331, %p332
      %p334 = pneg %p333
      // Predicated region
      $region45: #{tpu_custom_call.1} parent=5 // pred_check
        _
      $region46: #{tpu_custom_call.1} parent=5 // pred_check_branch
        %336 = sbr.rel (%p333) target = $region48
      $region47: #{tpu_custom_call.1} parent=5 // pred_region
        %s337 = ssub.s32 %s21, 1
        // Predicated region
        $region49: #{tpu_custom_call.1} parent=47 // pred_check
          %p338 = pneg %p59
        $region50: #{tpu_custom_call.1} parent=47 // pred_check_branch
          %340 = sbr.rel (%p338) target = $region52
        $region51: #{tpu_custom_call.1} parent=47 // pred_region
          %342 = dma.done [#allocation4], 256
        $region52: #{tpu_custom_call.1} parent=47 // pred_fallthru
          _
        %s343 = sand.u32 %s26, 1
        %s344 = scalar_lea.sflag [#allocation7], %s343
        %s345 = sand.u32 %s72, 1
        %s346 = smul.addr %s345, 128
        %s347 = scalar_lea.vmem [#allocation6], %s346
        // Predicated region
        $region53: #{tpu_custom_call.1} parent=47 // pred_check
          %p348 = pneg %p85
        $region54: #{tpu_custom_call.1} parent=47 // pred_check_branch
          %350 = sbr.rel (%p348) target = $region56
        $region55: #{tpu_custom_call.1} parent=47 // pred_region
          %352 = dma.done %s344, 2048
        $region56: #{tpu_custom_call.1} parent=47 // pred_fallthru
          _
        %s353 = sand.u32 %s26, 1
        %s354 = scalar_lea.sflag [#allocation7], %s353
        %s355 = sand.u32 %s98, 1
        %s356 = scalar_lea.vmem [#allocation8], %s355
        // Predicated region
        $region57: #{tpu_custom_call.1} parent=47 // pred_check
          %p357 = pneg %p111
        $region58: #{tpu_custom_call.1} parent=47 // pred_check_branch
          %359 = sbr.rel (%p357) target = $region60
        $region59: #{tpu_custom_call.1} parent=47 // pred_region
          %361 = dma.done %s354, 16
        $region60: #{tpu_custom_call.1} parent=47 // pred_fallthru
          _
        %s362 = sand.u32 %s124, 1
        %s363 = scalar_lea.sflag [#allocation10], %s362
        %s364 = sand.u32 %s124, 1
        %s365 = smul.addr %s364, 128
        %s366 = scalar_lea.vmem [#allocation9], %s365
        // Predicated region
        $region61: #{tpu_custom_call.1} parent=47 // pred_check
          %p367 = pneg %p137
        $region62: #{tpu_custom_call.1} parent=47 // pred_check_branch
          %369 = sbr.rel (%p367) target = $region64
        $region63: #{tpu_custom_call.1} parent=47 // pred_region
          %371 = dma.done %s363, 2048
        $region64: #{tpu_custom_call.1} parent=47 // pred_fallthru
          _
        %p372 = pneg %p59
        %p373 = pneg %p56
        %s374 = sand.u32 %s26, 1
        %s375 = scalar_lea.sflag [#allocation7], %s374
        %s376 = sand.u32 %s72, 1
        %s377 = smul.addr %s376, 128
        %s378 = scalar_lea.vmem [#allocation6], %s377
        %p379 = pneg %p85
        %p380 = pneg %p82
        %s381 = sand.u32 %s26, 1
        %s382 = scalar_lea.sflag [#allocation7], %s381
        %s383 = sand.u32 %s98, 1
        %s384 = scalar_lea.vmem [#allocation8], %s383
        %p385 = pneg %p111
        %p386 = pneg %p108
        %s387 = sand.u32 %s124, 1
        %s388 = scalar_lea.sflag [#allocation10], %s387
        %s389 = sand.u32 %s124, 1
        %s390 = smul.addr %s389, 128
        %s391 = scalar_lea.vmem [#allocation9], %s390
        %p392 = pneg %p137
        %p393 = pneg %p134
        %p394 = pneg %p158
        %p395 = pneg %p155
        %p396 = pneg %p179
        %p397 = pneg %p176
        %p398 = pneg %p200
        %p399 = pneg %p197
        %p400 = pneg %p226
        %p401 = pneg %p223
        %s402 = smul.u32 2, %s30
        %s403 = smul.u32 16, %s31
        %s404 = smul.u32 2, %s30
        %p405 = scmp.eq.s32.totalorder %s31, 0
        // Predicated region
        $region65: #{tpu_custom_call.1} parent=47 // pred_check
          %p406 = pneg %p405
        $region66: #{tpu_custom_call.1} parent=47 // pred_check_branch
          %408 = sbr.rel (%p406) target = $region68
        $region67: #{tpu_custom_call.1} parent=47 // pred_region
          %v409 = vld [vmem:[%s4] sm:$0x1]
          %v411 = vperm.slane %v409, 0
          %413 = vst [vmem:[#allocation2] sm:$0xff] %v411
          %414 = vst [vmem:[#allocation2 + $0x8] sm:$0xff] %v411
        $region68: #{tpu_custom_call.1} parent=47 // pred_fallthru
          _
        %v415 = vld [vmem:[#allocation3] sm:$0xff]
        %v416 = vld [vmem:[#allocation3 + $0x8] sm:$0xff]
        %v417 = vld [vmem:[%s347] sm:$0xff]
        %v418 = vld [vmem:[%s347 + $0x8] sm:$0xff]
        %v419 = vld [vmem:[%s347 + $0x10] sm:$0xff]
        %v420 = vld [vmem:[%s347 + $0x18] sm:$0xff]
        %v421 = vld [vmem:[%s347 + $0x20] sm:$0xff]
        %v422 = vld [vmem:[%s347 + $0x28] sm:$0xff]
        %v423 = vld [vmem:[%s347 + $0x30] sm:$0xff]
        %v424 = vld [vmem:[%s347 + $0x38] sm:$0xff]
        %v425 = vld [vmem:[%s347 + $0x40] sm:$0xff]
        %v426 = vld [vmem:[%s347 + $0x48] sm:$0xff]
        %v427 = vld [vmem:[%s347 + $0x50] sm:$0xff]
        %v428 = vld [vmem:[%s347 + $0x58] sm:$0xff]
        %v429 = vld [vmem:[%s347 + $0x60] sm:$0xff]
        %v430 = vld [vmem:[%s347 + $0x68] sm:$0xff]
        %v431 = vld [vmem:[%s347 + $0x70] sm:$0xff]
        %v432 = vld [vmem:[%s347 + $0x78] sm:$0xff]
        %v433 = vld [vmem:[%s356] sm:$0x1]
        %v435 = vperm.slane %v433, 0
        %437 = vmatpush.msra.mxu0 %v432
        %438 = vmatpush.msra.mxu0 %v431
        %439 = vmatpush.msra.mxu0 %v430
        %440 = vmatpush.msra.mxu0 %v429
        %441 = vmatpush.msra.mxu0 %v428
        %442 = vmatpush.msra.mxu0 %v427
        %443 = vmatpush.msra.mxu0 %v426
        %444 = vmatpush.msra.mxu0 %v425
        %445 = vmatpush.msra.mxu0 %v424
        %446 = vmatpush.msra.mxu0 %v423
        %447 = vmatpush.msra.mxu0 %v422
        %448 = vmatpush.msra.mxu0 %v421
        %449 = vmatpush.msra.mxu0 %v420
        %450 = vmatpush.msra.mxu0 %v419
        %451 = vmatpush.msra.mxu0 %v418
        %452 = vmatpush.msra.mxu0 %v417
        %453 = vmatmul.f32.gmra.mxu0 %v415
        %v454 = vpop.f32.mrf.mxu0
        %v455 = vadd.f32 %v435, %v454
        %456 = vmatmul.f32.gmra.mxu0 %v416
        %v457 = vpop.f32.mrf.mxu0
        %v458 = vadd.f32 %v435, %v457
        %459 = vdwg.mxu0
        %v460 = vmax.f32 %v455, 0.0
        %v461 = vmax.f32 %v458, 0.0
        %v462 = vld [vmem:[#allocation2] sm:$0xff]
        %v463 = vld [vmem:[#allocation2 + $0x8] sm:$0xff]
        %v464 = vld [vmem:[%s366] sm:$0xff]
        %v465 = vld [vmem:[%s366 + $0x8] sm:$0xff]
        %v466 = vld [vmem:[%s366 + $0x10] sm:$0xff]
        %v467 = vld [vmem:[%s366 + $0x18] sm:$0xff]
        %v468 = vld [vmem:[%s366 + $0x20] sm:$0xff]
        %v469 = vld [vmem:[%s366 + $0x28] sm:$0xff]
        %v470 = vld [vmem:[%s366 + $0x30] sm:$0xff]
        %v471 = vld [vmem:[%s366 + $0x38] sm:$0xff]
        %v472 = vld [vmem:[%s366 + $0x40] sm:$0xff]
        %v473 = vld [vmem:[%s366 + $0x48] sm:$0xff]
        %v474 = vld [vmem:[%s366 + $0x50] sm:$0xff]
        %v475 = vld [vmem:[%s366 + $0x58] sm:$0xff]
        %v476 = vld [vmem:[%s366 + $0x60] sm:$0xff]
        %v477 = vld [vmem:[%s366 + $0x68] sm:$0xff]
        %v478 = vld [vmem:[%s366 + $0x70] sm:$0xff]
        %v479 = vld [vmem:[%s366 + $0x78] sm:$0xff]
        %480 = vmatpush.msra.mxu0 %v479
        %481 = vmatpush.msra.mxu0 %v478
        %482 = vmatpush.msra.mxu0 %v477
        %483 = vmatpush.msra.mxu0 %v476
        %484 = vmatpush.msra.mxu0 %v475
        %485 = vmatpush.msra.mxu0 %v474
        %486 = vmatpush.msra.mxu0 %v473
        %487 = vmatpush.msra.mxu0 %v472
        %488 = vmatpush.msra.mxu0 %v471
        %489 = vmatpush.msra.mxu0 %v470
        %490 = vmatpush.msra.mxu0 %v469
        %491 = vmatpush.msra.mxu0 %v468
        %492 = vmatpush.msra.mxu0 %v467
        %493 = vmatpush.msra.mxu0 %v466
        %494 = vmatpush.msra.mxu0 %v465
        %495 = vmatpush.msra.mxu0 %v464
        %496 = vmatmul.f32.gmra.mxu0 %v460
        %v497 = vpop.f32.mrf.mxu0
        %v498 = vadd.f32 0.0, %v497
        %499 = vmatmul.f32.gmra.mxu0 %v461
        %v500 = vpop.f32.mrf.mxu0
        %v501 = vadd.f32 0.0, %v500
        %502 = vdwg.mxu0
        %v503 = vadd.f32 %v462, %v498
        %v504 = vadd.f32 %v463, %v501
        %505 = vst [vmem:[#allocation2] sm:$0xff] %v503
        %506 = vst [vmem:[#allocation2 + $0x8] sm:$0xff] %v504
        %p507 = scmp.eq.s32.totalorder %s31, 1
        // Predicated region
        $region69: #{tpu_custom_call.1} parent=47 // pred_check
          %p508 = pneg %p507
        $region70: #{tpu_custom_call.1} parent=47 // pred_check_branch
          %510 = sbr.rel (%p508) target = $region72
        $region71: #{tpu_custom_call.1} parent=47 // pred_region
          %v511 = vld [vmem:[#allocation2] sm:$0xff]
          %v512 = vld [vmem:[#allocation2 + $0x8] sm:$0xff]
          %v513 = vld [vmem:[#allocation3] sm:$0xff]
          %v514 = vld [vmem:[#allocation3 + $0x8] sm:$0xff]
          %v515 = vadd.f32 %v513, %v511
          %v516 = vadd.f32 %v514, %v512
          %517 = vadd.xlane.f32.xlu0 %v515
          %v518 = vpop.xlane.xlu0 %517
          %519 = vadd.xlane.f32.xlu0 %v516
          %v520 = vpop.xlane.xlu0 %519
          %v521 = vrcp.pop 128.0
          %v522 = vmul.f32 128.0, %v521
          %v523 = vsub.f32 1.0, %v522
          %v524 = vmul.f32 %v521, %v523
          %v525 = vadd.f32 %v521, %v524
          %vm526 = vweird.f32 %v521
          %v527 = vsel %vm526, %v521, %v525
          %v528 = vmul.f32 %v518, %v527
          %v529 = vmul.f32 %v520, %v527
          %v530 = vsub.f32 %v515, %v528
          %v531 = vsub.f32 %v516, %v529
          %v532 = vmul.f32 %v530, %v530
          %v533 = vmul.f32 %v531, %v531
          %534 = vadd.xlane.f32.xlu0 %v532
          %v535 = vpop.xlane.xlu0 %534
          %536 = vadd.xlane.f32.xlu0 %v533
          %v537 = vpop.xlane.xlu0 %536
          %v538 = vmul.f32 %v535, %v527
          %v539 = vmul.f32 %v537, %v527
          %v540 = vadd.f32 %v538, 1e-05
          %v541 = vadd.f32 %v539, 1e-05
          %v542 = vrsqrt.pop %v540
          %v543 = vmul.f32 %v542, %v540
          %v544 = vmul.f32 %v543, %v542
          %v545 = vmul.f32 0.5, %v544
          %v546 = vsub.f32 1.5, %v545
          %v547 = vmul.f32 %v542, %v546
          %vm548 = vweird.f32 %v540
          %vm549 = vweird.f32 %v542
          %vm550 = vmor %vm548, %vm549
          %v551 = vsel %vm550, %v542, %v547
          %v552 = vrsqrt.pop %v541
          %v553 = vmul.f32 %v552, %v541
          %v554 = vmul.f32 %v553, %v552
          %v555 = vmul.f32 0.5, %v554
          %v556 = vsub.f32 1.5, %v555
          %v557 = vmul.f32 %v552, %v556
          %vm558 = vweird.f32 %v541
          %vm559 = vweird.f32 %v552
          %vm560 = vmor %vm558, %vm559
          %v561 = vsel %vm560, %v552, %v557
          %v562 = vmul.f32 %v530, %v551
          %v563 = vmul.f32 %v531, %v561
          %v564 = vld [vmem:[%s5] sm:$0x1]
          %v566 = vperm.slane %v564, 0
          %v568 = vmul.f32 %v562, %v566
          %v569 = vmul.f32 %v563, %v566
          %v570 = vld [vmem:[%s6] sm:$0x1]
          %v572 = vperm.slane %v570, 0
          %v574 = vadd.f32 %v568, %v572
          %v575 = vadd.f32 %v569, %v572
          %576 = vst [vmem:[#allocation11] sm:$0xff] %v574
          %577 = vst [vmem:[#allocation11 + $0x8] sm:$0xff] %v575
        $region72: #{tpu_custom_call.1} parent=47 // pred_fallthru
          _
        // Predicated region
        $region73: #{tpu_custom_call.1} parent=47 // pred_check
          %p578 = pneg %p223
        $region74: #{tpu_custom_call.1} parent=47 // pred_check_branch
          %580 = sbr.rel (%p578) target = $region76
        $region75: #{tpu_custom_call.1} parent=47 // pred_region
          %s581 = smul.u32 2, %s30
          %583 = vsyncadd [#allocation5], 0
          %s584 = smul.addr %s581, 8
          %s585 = scalar_lea.hbm %s7, %s584
          %s586 = sshll.u32 [#allocation11], 4
          %s587 = int_to_ptr.vmem [resolvable:$true] %s586
          %s588 = sshll.u32 %s585, 4
          %s589 = int_to_ptr.hbm [resolvable:$true] %s588
          %594 = dma.vmem_to_hbm [thread:$0]  %s587, 256, %s589, [#allocation5], 128, 128, 8
        $region76: #{tpu_custom_call.1} parent=47 // pred_fallthru
          _
        // Predicated region
        $region77: #{tpu_custom_call.1} parent=47 // pred_check
          %p595 = pneg %p223
        $region78: #{tpu_custom_call.1} parent=47 // pred_check_branch
          %597 = sbr.rel (%p595) target = $region80
        $region79: #{tpu_custom_call.1} parent=47 // pred_region
          %599 = dma.done [#allocation5], 256
        $region80: #{tpu_custom_call.1} parent=47 // pred_fallthru
          _
      $region48: #{tpu_custom_call.1} parent=5 // pred_fallthru
        _
      %p600 = scmp.le.s32.totalorder 2, %s21
      // Predicated region
      $region81: #{tpu_custom_call.1} parent=5 // pred_check
        %p601 = pneg %p600
      $region82: #{tpu_custom_call.1} parent=5 // pred_check_branch
        %603 = sbr.rel (%p601) target = $region84
      $region83: #{tpu_custom_call.1} parent=5 // pred_region
        %s604 = ssub.s32 %s21, 2
      $region84: #{tpu_custom_call.1} parent=5 // pred_fallthru
        _
    $region6: #{tpu_custom_call.1} parent=1 // loop_footer
      %s25 = sadd.s32 1, %s21
    $region7: #{tpu_custom_call.1} parent=1 // loop_footer_branch
      %20 = sbr.rel target = $region3
    $region8: #{tpu_custom_call.1} parent=1 // loop_exit
      _
    %605 = vsyncpa [#allocation4], 1
    %s606 = scalar_lea.sflag [#allocation4], 1
    %607 = vsyncpa %s606, 1
    %608 = vsyncpa [#allocation7], 1
    %s609 = scalar_lea.sflag [#allocation7], 1
    %610 = vsyncpa %s609, 1
    %611 = vsyncpa [#allocation10], 1
    %s612 = scalar_lea.sflag [#allocation10], 1
    %613 = vsyncpa %s612, 1
    %614 = vsyncpa [#allocation5], 1
    %s615 = scalar_lea.sflag [#allocation5], 1
    %616 = vsyncpa %s615, 1

</llo_original>
